<compile_context>
chip_gen: v7x
topology: tpu7x:2x2x1
jax: 0.10.0
libtpu: 0.0.40
codegen_flags: <defaults>
</compile_context>

<pallas_src>
from functools import partial

import jax
import jax.numpy as jnp
from jax.experimental import pallas as pl
from jax.experimental.pallas import tpu as pltpu


def _logreg_kernel(b_ref, x_ref, w_ref, o_ref):
    # b_ref: (1,) f32 in SMEM; x_ref: (tile, K); w_ref: (K, P); o_ref: (tile, P)
    z = jnp.dot(x_ref[...], w_ref[...], preferred_element_type=jnp.float32)
    z = z + b_ref[0]                       # scalar bias from SMEM
    o_ref[...] = jax.nn.sigmoid(z).astype(o_ref.dtype)


def _round_up(v, m):
    return ((v + m - 1) // m) * m


def _gen_params():
    """Per-generation (x-stream VMEM budget, vmem_limit_bytes, two_tensorcores)."""
    kind = ""
    try:
        kind = jax.devices()[0].device_kind.lower()
    except Exception:
        pass
    if "v7" in kind:                       # 64 MiB physical VMEM per core, 2 TCs
        return 20 << 20, 48 << 20, True
    if "v6" in kind:                       # 128 MiB physical VMEM
        return 24 << 20, 64 << 20, False
    if "v5" in kind or "v4" in kind:       # 128 MiB physical VMEM
        return 16 << 20, 48 << 20, False
    return 6 << 20, None, False            # conservative unknown-chip fallback


def _choose_pack(n, f):
    """Rows packed per lane-dense row.  p*F must be a multiple of 128; prefer a
    larger p (denser output lanes) when it divides N, capped at p*F <= 1024 so
    the extra block-diagonal MXU work stays negligible."""
    if f >= 128 or 128 % f != 0:
        return 1
    base = 128 // f
    for mult in (16, 8, 4, 2):
        p = base * mult
        if p * f <= 1024 and n % p == 0:
            return p
    return base


def _pick_tile_rows(total_rows, k, itemsize, budget, two_cores, tile_rows):
    """Rows (of the packed view) per grid step, sized against the VMEM budget
    for the double-buffered x stream + lane-padded output buffers."""
    if tile_rows is None:
        x_row = _round_up(k, 128) * itemsize      # lane-padded x row in VMEM
        o_row = 128 * itemsize                    # lane-padded output row in VMEM
        tile_rows = max(8, (budget // (2 * (x_row + o_row))) // 8 * 8)
        tile_rows = min(tile_rows, 65536)
    else:
        tile_rows = max(8, _round_up(tile_rows, 8))
    if total_rows <= 8:
        return total_rows                         # full-extent block
    tile_rows = min(tile_rows, _round_up(total_rows, 8))
    if two_cores and tile_rows >= total_rows:
        # Keep >= 2 grid steps so the "parallel" axis can use both v7x cores.
        tile_rows = max(8, _round_up(pl.cdiv(total_rows, 2), 8))
    return tile_rows


@partial(jax.jit, static_argnames=("tile_rows",))
def logistic_regression(x, w, b, tile_rows=None):
    """sigmoid(x @ w + b).  x: (N, F); w: (F, 1); b: (1,).  Returns (N, 1)."""
    N, F = x.shape
    budget, vmem_limit, two_cores = _gen_params()

    p = _choose_pack(N, F)
    if p > 1:
        n_pack = _round_up(N, p)
        if n_pack != N:
            # Only when N is not a multiple of the minimal pack (<= p-1 rows).
            x = jnp.pad(x, ((0, n_pack - N), (0, 0)))
        # Free row-major reinterpretation: p rows of F features -> one p*F-lane row.
        x_view = x.reshape(n_pack // p, p * F)
        # Block-diagonal weight: column j holds w in rows [j*F, (j+1)*F).
        eye = jnp.eye(p, dtype=w.dtype)
        w_eff = (eye[:, None, :] * w.reshape(1, F, 1)).reshape(p * F, p)
    else:
        x_view = x
        w_eff = w.reshape(F, 1)

    total_rows, K = x_view.shape
    P = p
    w_eff = w_eff.astype(x.dtype)
    b_smem = jnp.asarray(b, jnp.float32).reshape((1,))

    tile = _pick_tile_rows(total_rows, K, x.dtype.itemsize, budget, two_cores,
                           tile_rows)
    grid = (pl.cdiv(total_rows, tile),)

    out = pl.pallas_call(
        _logreg_kernel,
        out_shape=jax.ShapeDtypeStruct((total_rows, P), x.dtype),
        grid=grid,
        in_specs=[
            # Bias: true scalar in SMEM, available every grid step.
            pl.BlockSpec(memory_space=pltpu.MemorySpace.SMEM),
            # x: one (tile, K) batch tile per step, auto double-buffered.
            pl.BlockSpec((tile, K), lambda i: (i, 0)),
            # Weight: constant block -> stays resident in VMEM across the grid.
            pl.BlockSpec((K, P), lambda i: (0, 0)),
        ],
        # Full-minor-width output block -> contiguous HBM writeback.
        out_specs=pl.BlockSpec((tile, P), lambda i: (i, 0)),
        compiler_params=pltpu.CompilerParams(
            dimension_semantics=("parallel",),
            vmem_limit_bytes=vmem_limit),
    )(b_smem, x_view, w_eff)

    # Un-pack: row r, col j of the packed output is original row r*p + j.
    return out.reshape(-1, 1)[:N]


if __name__ == "__main__":
    key = jax.random.PRNGKey(0)
    kx, kw, kb, kx2, kx3, kx4, kw4 = jax.random.split(key, 7)

    # Small shapes matching the module: batch=8, n_input_features=32.
    N, F = 8, 32
    x = jax.random.normal(kx, (N, F), dtype=jnp.float32)

    # Deterministic init mimicking nn.Linear's uniform(-1/sqrt(F), 1/sqrt(F)).
    bound = 1.0 / jnp.sqrt(jnp.float32(F))
    w = jax.random.uniform(kw, (F, 1), dtype=jnp.float32, minval=-bound, maxval=bound)
    b = jax.random.uniform(kb, (1,), dtype=jnp.float32, minval=-bound, maxval=bound)

    out = logistic_regression(x, w, b)
    jax.block_until_ready(out)
    ref = jax.nn.sigmoid(x @ w + b)
    assert out.shape == (N, 1)
    assert jnp.allclose(out, ref, atol=1e-5, rtol=1e-5)

    # Multi-tile + ragged trailing block (no wrapper padding), forced small tile.
    N2 = 200
    x2 = jax.random.normal(kx2, (N2, F), dtype=jnp.float32)
    out2 = logistic_regression(x2, w, b, tile_rows=16)
    jax.block_until_ready(out2)
    ref2 = jax.nn.sigmoid(x2 @ w + b)
    assert out2.shape == (N2, 1)
    assert jnp.allclose(out2, ref2, atol=1e-5, rtol=1e-5)

    # Batch not divisible by the minimal pack factor (tiny-pad fallback path).
    N3 = 203
    x3 = jax.random.normal(kx3, (N3, F), dtype=jnp.float32)
    out3 = logistic_regression(x3, w, b)
    jax.block_until_ready(out3)
    ref3 = jax.nn.sigmoid(x3 @ w + b)
    assert out3.shape == (N3, 1)
    assert jnp.allclose(out3, ref3, atol=1e-5, rtol=1e-5)

    # Feature count that cannot be lane-packed (generic unpacked path).
    N4, F4 = 10, 48
    x4 = jax.random.normal(kx4, (N4, F4), dtype=jnp.float32)
    bound4 = 1.0 / jnp.sqrt(jnp.float32(F4))
    w4 = jax.random.uniform(kw4, (F4, 1), dtype=jnp.float32, minval=-bound4, maxval=bound4)
    out4 = logistic_regression(x4, w4, b)
    jax.block_until_ready(out4)
    ref4 = jax.nn.sigmoid(x4 @ w4 + b)
    assert out4.shape == (N4, 1)
    assert jnp.allclose(out4, ref4, atol=1e-5, rtol=1e-5)

    print("KERNEL_OK")
</pallas_src>

<mosaic_0001>
module attributes {stable_mosaic.version = 11 : i64} {
  func.func @_logreg_kernel(%arg0: i32, %arg1: memref<1xf32, #tpu.memory_space<smem>>, %arg2: memref<1x256xf32, #tpu.memory_space<vmem>>, %arg3: memref<256x8xf32, #tpu.memory_space<vmem>>, %arg4: memref<1x8xf32, #tpu.memory_space<vmem>>) attributes {dimension_semantics = [#tpu.dimension_semantics<parallel>], iteration_bounds = array<i64: 1>, scalar_prefetch = 0 : i64, scratch_operands = 0 : i64, tpu.core_type = #tpu.core_type<tc>, window_params = [{transform_indices = @transform_0, window_bounds = array<i64: 1>}, {transform_indices = @transform_1, window_bounds = array<i64: 1, 256>}, {pipeline_mode = #tpu.pipeline_mode<synchronous>, transform_indices = @transform_2, window_bounds = array<i64: 256, 8>}, {transform_indices = @transform_3, window_bounds = array<i64: 1, 8>}]} {
    %c0 = arith.constant 0 : index
    %c0_0 = arith.constant 0 : index
    %0 = vector.load %arg2[%c0, %c0_0] : memref<1x256xf32, #tpu.memory_space<vmem>>, vector<1x256xf32>
    %c0_1 = arith.constant 0 : index
    %c0_2 = arith.constant 0 : index
    %1 = vector.load %arg3[%c0_1, %c0_2] : memref<256x8xf32, #tpu.memory_space<vmem>>, vector<256x8xf32>
    %cst = arith.constant dense<0.000000e+00> : vector<1x8xf32>
    %2 = tpu.matmul %0, %1, %cst {dimension_numbers = #tpu.dot_dimension_numbers<[1], [0], [0], [1], [0, 0, 1, 1], [], []>} : vector<1x256xf32>, vector<256x8xf32>, vector<1x8xf32> -> vector<1x8xf32>
    %c0_3 = arith.constant 0 : index
    %3 = memref.load %arg1[%c0_3] : memref<1xf32, #tpu.memory_space<smem>>
    %4 = vector.broadcast %3 : f32 to vector<1x8xf32>
    %5 = arith.addf %2, %4 : vector<1x8xf32>
    %6 = arith.negf %5 : vector<1x8xf32>
    %7 = math.exp %6 : vector<1x8xf32>
    %cst_4 = arith.constant 1.000000e+00 : f32
    %8 = vector.broadcast %cst_4 : f32 to vector<1x8xf32>
    %9 = arith.addf %8, %7 : vector<1x8xf32>
    %10 = arith.divf %8, %9 : vector<1x8xf32>
    %c0_5 = arith.constant 0 : index
    %c0_6 = arith.constant 0 : index
    %11 = vector.load %arg4[%c0_5, %c0_6] : memref<1x8xf32, #tpu.memory_space<vmem>>, vector<1x8xf32>
    tpu.vector_store %arg4[%c0_5, %c0_6], %10 {strides = array<i32>} : memref<1x8xf32, #tpu.memory_space<vmem>>, vector<1x8xf32>,
    return
  }
  func.func @transform_0(%arg0: i32) -> i32 {
    %c0_i32 = arith.constant 0 : i32
    %c0_i32_0 = arith.constant 0 : i32
    return %c0_i32 : i32
  }
  func.func @transform_1(%arg0: i32) -> (i32, i32) {
    %c0_i32 = arith.constant 0 : i32
    %c0_i32_0 = arith.constant 0 : i32
    return %arg0, %c0_i32 : i32, i32
  }
  func.func @transform_2(%arg0: i32) -> (i32, i32) {
    %c0_i32 = arith.constant 0 : i32
    %c0_i32_0 = arith.constant 0 : i32
    %c0_i32_1 = arith.constant 0 : i32
    return %c0_i32, %c0_i32_0 : i32, i32
  }
  func.func @transform_3(%arg0: i32) -> (i32, i32) {
    %c0_i32 = arith.constant 0 : i32
    %c0_i32_0 = arith.constant 0 : i32
    return %arg0, %c0_i32 : i32, i32
  }
}

</mosaic_0001>

<llo_original>
// kernel: logistic_regression.1
$region0: #{logistic_regression.1}
  #allocation0 [shape = 'u32[]', space=smem, size = 0x4, offset = 0x4, fixed_abs, tag = 'smem constant byte address 0x4 - core index']
  #allocation1 [shape = 'u32[144,128]{1,0:T(1,128)}', space=vmem, size = 0x12000, scoped, tag = 'internal scratch']
  #allocation2 [shape = 'f32[1]{0:T(128)S(6)}', space=smem, size = 0x200, scoped, tag = 'scoped memory for logistic_regression.1']
  %s0 = inlined_call_operand.<no memory space> [shape: f32[1], index: 0, kind: input, shape index: {}]
  %s1 = inlined_call_operand.vmem [shape: f32[1,256], index: 1, kind: input, shape index: {}]
  %s2 = inlined_call_operand.vmem [shape: f32[256,8], index: 2, kind: input, shape index: {}]
  %s3 = inlined_call_operand.hbm [shape: f32[1,8], index: 3, kind: output, shape index: {}]
  %s4 = sld [smem:[#allocation0]]
  $region22: #{logistic_regression.1} parent=0
    _
  %s6 = ssub.s32 1, %s4
  %s7 = scalar_select 0, %s6, %s4
  %8 = sst [smem:[#allocation2]] %s0
  $region1: #{logistic_regression.1} parent=0
    #allocation3 [shape = 'u8[512]{0}', space=vmem, size = 0x400, scoped, tag = 'output window, operand 0, single buffered']
    #allocation4 [shape = 's32[1]{0}', space=sflag, size = 0x4, scoped, tag = 'scoped memory for logistic_regression.1']
    %9 = vsyncpa [#allocation4], 0
    // Predicated region
    $region2: #{logistic_regression.1} parent=1 // pred_check
      _
    $region3: #{logistic_regression.1} parent=1 // pred_check_branch
      %11 = sbr.rel (0) target = $region5
    $region4: #{logistic_regression.1} parent=1 // pred_region
      _
    $region5: #{logistic_regression.1} parent=1 // pred_fallthru
      _
    // Predicated region
    $region6: #{logistic_regression.1} parent=1 // pred_check
      _
    $region7: #{logistic_regression.1} parent=1 // pred_check_branch
      %13 = sbr.rel (0) target = $region9
    $region8: #{logistic_regression.1} parent=1 // pred_region
      _
    $region9: #{logistic_regression.1} parent=1 // pred_fallthru
      _
    // Predicated region
    $region10: #{logistic_regression.1} parent=1 // pred_check
      _
    $region11: #{logistic_regression.1} parent=1 // pred_check_branch
      %15 = sbr.rel (0) target = $region13
    $region12: #{logistic_regression.1} parent=1 // pred_region
      _
    $region13: #{logistic_regression.1} parent=1 // pred_fallthru
      _
    %v16 = vld [vmem:[%s1] sm:$0x3]
    %v17 = vld [vmem:[%s2] sm:$0xff]
    %v18 = vld [vmem:[%s2 + $0x8] sm:$0xff]
    %v19 = vld [vmem:[%s2 + $0x10] sm:$0xff]
    %v20 = vld [vmem:[%s2 + $0x18] sm:$0xff]
    %v21 = vld [vmem:[%s2 + $0x20] sm:$0xff]
    %v22 = vld [vmem:[%s2 + $0x28] sm:$0xff]
    %v23 = vld [vmem:[%s2 + $0x30] sm:$0xff]
    %v24 = vld [vmem:[%s2 + $0x38] sm:$0xff]
    %v25 = vld [vmem:[%s2 + $0x40] sm:$0xff]
    %v26 = vld [vmem:[%s2 + $0x48] sm:$0xff]
    %v27 = vld [vmem:[%s2 + $0x50] sm:$0xff]
    %v28 = vld [vmem:[%s2 + $0x58] sm:$0xff]
    %v29 = vld [vmem:[%s2 + $0x60] sm:$0xff]
    %v30 = vld [vmem:[%s2 + $0x68] sm:$0xff]
    %v31 = vld [vmem:[%s2 + $0x70] sm:$0xff]
    %v32 = vld [vmem:[%s2 + $0x78] sm:$0xff]
    %v33 = vld [vmem:[%s2 + $0x80] sm:$0xff]
    %v34 = vld [vmem:[%s2 + $0x88] sm:$0xff]
    %v35 = vld [vmem:[%s2 + $0x90] sm:$0xff]
    %v36 = vld [vmem:[%s2 + $0x98] sm:$0xff]
    %v37 = vld [vmem:[%s2 + $0xa0] sm:$0xff]
    %v38 = vld [vmem:[%s2 + $0xa8] sm:$0xff]
    %v39 = vld [vmem:[%s2 + $0xb0] sm:$0xff]
    %v40 = vld [vmem:[%s2 + $0xb8] sm:$0xff]
    %v41 = vld [vmem:[%s2 + $0xc0] sm:$0xff]
    %v42 = vld [vmem:[%s2 + $0xc8] sm:$0xff]
    %v43 = vld [vmem:[%s2 + $0xd0] sm:$0xff]
    %v44 = vld [vmem:[%s2 + $0xd8] sm:$0xff]
    %v45 = vld [vmem:[%s2 + $0xe0] sm:$0xff]
    %v46 = vld [vmem:[%s2 + $0xe8] sm:$0xff]
    %v47 = vld [vmem:[%s2 + $0xf0] sm:$0xff]
    %v48 = vld [vmem:[%s2 + $0xf8] sm:$0xff]
    %s49 = sld [smem:[#allocation2]]
    %v50 = vstv %s49
    %v52 = vlaneseq
    %v53 = vshrl.u32 %v52, 7
    %v54 = vsub.s32 0, %v53
    %v55 = vrot.slane %v16, %v54
    %v56 = vlaneseq
    %v57 = vshrl.u32 %v56, 7
    %v58 = vsub.s32 1, %v57
    %v59 = vrot.slane %v16, %v58
    %62 = vmatprep.subr.mxu0 0.0
    %63 = vmatpush1.msra.mxu0 %v17
    %64 = vmatprep.subr.mxu0 0.0
    %65 = vmatpush1.msra.mxu0 %v18
    %66 = vmatprep.subr.mxu0 0.0
    %67 = vmatpush1.msra.mxu0 %v19
    %68 = vmatprep.subr.mxu0 0.0
    %69 = vmatpush1.msra.mxu0 %v20
    %70 = vmatprep.subr.mxu0 0.0
    %71 = vmatpush1.msra.mxu0 %v21
    %72 = vmatprep.subr.mxu0 0.0
    %73 = vmatpush1.msra.mxu0 %v22
    %74 = vmatprep.subr.mxu0 0.0
    %75 = vmatpush1.msra.mxu0 %v23
    %76 = vmatprep.subr.mxu0 0.0
    %77 = vmatpush1.msra.mxu0 %v24
    %78 = vmatprep.subr.mxu0 0.0
    %79 = vmatpush1.msra.mxu0 %v25
    %80 = vmatprep.subr.mxu0 0.0
    %81 = vmatpush1.msra.mxu0 %v26
    %82 = vmatprep.subr.mxu0 0.0
    %83 = vmatpush1.msra.mxu0 %v27
    %84 = vmatprep.subr.mxu0 0.0
    %85 = vmatpush1.msra.mxu0 %v28
    %86 = vmatprep.subr.mxu0 0.0
    %87 = vmatpush1.msra.mxu0 %v29
    %88 = vmatprep.subr.mxu0 0.0
    %89 = vmatpush1.msra.mxu0 %v30
    %90 = vmatprep.subr.mxu0 0.0
    %91 = vmatpush1.msra.mxu0 %v31
    %92 = vmatprep.subr.mxu0 0.0
    %93 = vmatpush1.msra.mxu0 %v32
    %94 = vmatprep.subr.mxu0 0.0
    %95 = vmatpush1.msra.mxu0 %v33
    %96 = vmatprep.subr.mxu0 0.0
    %97 = vmatpush1.msra.mxu0 %v34
    %98 = vmatprep.subr.mxu0 0.0
    %99 = vmatpush1.msra.mxu0 %v35
    %100 = vmatprep.subr.mxu0 0.0
    %101 = vmatpush1.msra.mxu0 %v36
    %102 = vmatprep.subr.mxu0 0.0
    %103 = vmatpush1.msra.mxu0 %v37
    %104 = vmatprep.subr.mxu0 0.0
    %105 = vmatpush1.msra.mxu0 %v38
    %106 = vmatprep.subr.mxu0 0.0
    %107 = vmatpush1.msra.mxu0 %v39
    %108 = vmatprep.subr.mxu0 0.0
    %109 = vmatpush1.msra.mxu0 %v40
    %110 = vmatprep.subr.mxu0 0.0
    %111 = vmatpush1.msra.mxu0 %v41
    %112 = vmatprep.subr.mxu0 0.0
    %113 = vmatpush1.msra.mxu0 %v42
    %114 = vmatprep.subr.mxu0 0.0
    %115 = vmatpush1.msra.mxu0 %v43
    %116 = vmatprep.subr.mxu0 0.0
    %117 = vmatpush1.msra.mxu0 %v44
    %118 = vmatprep.subr.mxu0 0.0
    %119 = vmatpush1.msra.mxu0 %v45
    %120 = vmatprep.subr.mxu0 0.0
    %121 = vmatpush1.msra.mxu0 %v46
    %122 = vmatprep.subr.mxu0 0.0
    %123 = vmatpush1.msra.mxu0 %v47
    %124 = vmatprep.subr.mxu0 0.0
    %125 = vmatpush1.msra.mxu0 %v48
    %126 = vmatprep.mubr.f32.mxu0 %v59
    %127 = vmatmul.mubr.f32.gmra.mrb[0].mxu0 %v55
    %v128 = vpop.f32.mrb[0].mxu0
    %v129 = vadd.f32 %v50, %v128
    %v130 = vpop.f32.mrb[0].mxu0
    %131 = vdwg.mxu0
    %v132 = vxor.u32 %v129, 2147483648
    %v133 = vmul.f32 %v132, 1.442695
    %v134 = vpow.pop %v133
    %v135 = vadd.f32 %v134, 1.0
    %v136 = vrcp.pop %v135
    %v137 = vmul.f32 1.0, %v136
    %vm138 = vcmask 57344
    %139 = vst.msk [vmem:[#allocation3] sm:$0x1] %vm138, %v137
    // Predicated region
    $region14: #{logistic_regression.1} parent=1 // pred_check
      _
    $region15: #{logistic_regression.1} parent=1 // pred_check_branch
      %141 = sbr.rel (0) target = $region17
    $region16: #{logistic_regression.1} parent=1 // pred_region
      %s143 = ssub.s32 16, 16
      %144 = vsyncadd [#allocation4], %s143
      %s146 = sshll.u32 [#allocation3], 4
      %s147 = int_to_ptr.vmem [resolvable:$true] %s146
      %149 = dma.vmem_to_hbm [thread:$0]  %s147, 16, %s3, [#allocation4]
    $region17: #{logistic_regression.1} parent=1 // pred_fallthru
      _
    // Predicated region
    $region18: #{logistic_regression.1} parent=1 // pred_check
      _
    $region19: #{logistic_regression.1} parent=1 // pred_check_branch
      %151 = sbr.rel (0) target = $region21
    $region20: #{logistic_regression.1} parent=1 // pred_region
      %152 = dma.done [#allocation4], 16
    $region21: #{logistic_regression.1} parent=1 // pred_fallthru
      _
    %153 = vsyncpa [#allocation4], 1

</llo_original>
